<compile_context>
chip_gen: v6e
topology: v6e:2x2x1
jax: 0.10.0
libtpu: 0.0.40
codegen_flags: <defaults>
</compile_context>

<pallas_src>
import jax
import jax.numpy as jnp
from jax.experimental import pallas as pl
from jax.experimental.pallas import tpu as pltpu


_LANE_COLS = 512                      # lane-dense width (multiple of 128)
_MAX_TILE_BYTES = 8 * 1024 * 1024     # per-buffer tile budget; fits all chip gens


def _modrelu_kernel(bias_ref, x_ref, o_ref):
    # bias_ref: SMEM f32 scalar (shape (1,)); x_ref/o_ref: VMEM tiles.
    b = bias_ref[0]
    x = x_ref[...]
    xf = x.astype(jnp.float32)
    mag = jnp.abs(xf)
    gated = jnp.maximum(mag + b, 0.0)          # relu(|x| + b), scalar 0 (no broadcast operand)
    # Exact PyTorch semantics: multiply by x / |x| (NaN where x == 0).
    o_ref[...] = (gated * xf / mag).astype(o_ref.dtype)


def modrelu(x_nchw: jax.Array, relubias: jax.Array, *,
            lane_cols: int = _LANE_COLS,
            max_tile_bytes: int = _MAX_TILE_BYTES) -> jax.Array:
    """Apply modReLU elementwise to an NCHW tensor.

    Args:
      x_nchw: float array of shape (N, C, H, W).
      relubias: float array of shape (1,), the learnable threshold.
    Returns:
      Array of same shape/dtype as x_nchw.
    """
    orig_shape = x_nchw.shape
    dtype = x_nchw.dtype
    total = x_nchw.size

    # --- Flatten to a lane-dense 2-D slab: (rows, lane_cols), lane_cols % 128 == 0.
    flat = x_nchw.reshape(-1)
    padded_total = ((total + lane_cols - 1) // lane_cols) * lane_cols
    if padded_total != total:
        # Pad with 1.0 so the padded region is numerically benign (discarded anyway).
        flat = jnp.pad(flat, (0, padded_total - total), constant_values=1)
    rows = padded_total // lane_cols
    x2d = flat.reshape(rows, lane_cols)

    # --- Choose a row block: multiple of 8 sublanes, sized to a few MiB per tile.
    bytes_per_row = lane_cols * x2d.dtype.itemsize
    max_rows = max(8, ((max_tile_bytes // bytes_per_row) // 8) * 8)
    if rows <= max_rows:
        block_rows = rows                      # single tile: block == full array dim
    else:
        block_rows = max_rows
        padded_rows = ((rows + block_rows - 1) // block_rows) * block_rows
        if padded_rows != rows:
            x2d = jnp.pad(x2d, ((0, padded_rows - rows), (0, 0)), constant_values=1)
            rows = padded_rows
    grid = (rows // block_rows,)

    out2d = pl.pallas_call(
        _modrelu_kernel,
        out_shape=jax.ShapeDtypeStruct((rows, lane_cols), dtype),
        grid_spec=pltpu.PrefetchScalarGridSpec(
            num_scalar_prefetch=0,
            grid=grid,
            in_specs=[
                pl.BlockSpec(memory_space=pltpu.MemorySpace.SMEM),        # f32 bias scalar
                pl.BlockSpec((block_rows, lane_cols), lambda i: (i, 0)),  # x row tile
            ],
            out_specs=pl.BlockSpec((block_rows, lane_cols), lambda i: (i, 0)),
        ),
        compiler_params=pltpu.CompilerParams(
            dimension_semantics=("parallel",),      # independent tiles; shards across TCs on v7x
            vmem_limit_bytes=48 * 1024 * 1024,      # headroom for double-buffered in+out tiles
        ),
        input_output_aliases={1: 0},                # x is never re-read after the store
    )(relubias.astype(jnp.float32), x2d)

    return out2d.reshape(-1)[:total].reshape(orig_shape)


if __name__ == "__main__":
    key = jax.random.PRNGKey(0)
    k1, k2 = jax.random.split(key)

    # --- Test 1: small NCHW input, zero-initialized bias (matches module __init__).
    x = jax.random.normal(k1, (2, 4, 16, 16), dtype=jnp.float32)
    relubias = jnp.zeros((1,), dtype=jnp.float32)

    out = modrelu(x, relubias)
    out = jax.block_until_ready(out)

    ref = jnp.maximum(jnp.abs(x) + relubias[0], 0.0) * x / jnp.abs(x)
    assert out.shape == x.shape and out.dtype == x.dtype
    assert jnp.allclose(out, ref, atol=1e-6, rtol=1e-6)

    # --- Test 2: non-128-multiple spatial size + nonzero bias, with a tiny tile
    # budget to exercise the padded, multi-tile grid path.
    x2 = jax.random.normal(k2, (2, 4, 31, 33), dtype=jnp.float32)
    bias2 = jnp.array([-0.1], dtype=jnp.float32)
    out2 = jax.block_until_ready(
        modrelu(x2, bias2, max_tile_bytes=8 * _LANE_COLS * 4))
    ref2 = jnp.maximum(jnp.abs(x2) + bias2[0], 0.0) * x2 / jnp.abs(x2)
    assert out2.shape == x2.shape and out2.dtype == x2.dtype
    assert jnp.allclose(out2, ref2, atol=1e-6, rtol=1e-6)

    print("KERNEL_OK")
</pallas_src>

<mosaic_0001>
module attributes {stable_mosaic.version = 11 : i64} {
  func.func @_modrelu_kernel(%arg0: i32, %arg1: memref<1xf32, #tpu.memory_space<smem>>, %arg2: memref<4x512xf32, #tpu.memory_space<vmem>>, %arg3: memref<4x512xf32, #tpu.memory_space<vmem>>) attributes {dimension_semantics = [#tpu.dimension_semantics<parallel>], iteration_bounds = array<i64: 1>, scalar_prefetch = 0 : i64, scratch_operands = 0 : i64, tpu.core_type = #tpu.core_type<tc>, window_params = [{transform_indices = @transform_0, window_bounds = array<i64: 1>}, {transform_indices = @transform_1, window_bounds = array<i64: 4, 512>}, {transform_indices = @transform_2, window_bounds = array<i64: 4, 512>}]} {
    %c0 = arith.constant 0 : index
    %0 = memref.load %arg1[%c0] : memref<1xf32, #tpu.memory_space<smem>>
    %c0_0 = arith.constant 0 : index
    %c0_1 = arith.constant 0 : index
    %1 = vector.load %arg2[%c0_0, %c0_1] : memref<4x512xf32, #tpu.memory_space<vmem>>, vector<4x512xf32>
    %2 = math.absf %1 : vector<4x512xf32>
    %3 = vector.broadcast %0 : f32 to vector<4x512xf32>
    %4 = arith.addf %2, %3 : vector<4x512xf32>
    %cst = arith.constant 0.000000e+00 : f32
    %5 = vector.broadcast %cst : f32 to vector<4x512xf32>
    %6 = arith.maximumf %4, %5 : vector<4x512xf32>
    %7 = arith.mulf %6, %1 : vector<4x512xf32>
    %8 = arith.divf %7, %2 : vector<4x512xf32>
    %c0_2 = arith.constant 0 : index
    %c0_3 = arith.constant 0 : index
    %9 = vector.load %arg3[%c0_2, %c0_3] : memref<4x512xf32, #tpu.memory_space<vmem>>, vector<4x512xf32>
    tpu.vector_store %arg3[%c0_2, %c0_3], %8 {strides = array<i32>} : memref<4x512xf32, #tpu.memory_space<vmem>>, vector<4x512xf32>,
    return
  }
  func.func @transform_0(%arg0: i32) -> i32 {
    %c0_i32 = arith.constant 0 : i32
    %c0_i32_0 = arith.constant 0 : i32
    return %c0_i32 : i32
  }
  func.func @transform_1(%arg0: i32) -> (i32, i32) {
    %c0_i32 = arith.constant 0 : i32
    %c0_i32_0 = arith.constant 0 : i32
    return %arg0, %c0_i32 : i32, i32
  }
  func.func @transform_2(%arg0: i32) -> (i32, i32) {
    %c0_i32 = arith.constant 0 : i32
    %c0_i32_0 = arith.constant 0 : i32
    return %arg0, %c0_i32 : i32, i32
  }
}

</mosaic_0001>

<llo_original>
// kernel: tpu_custom_call.1
$region0: #{tpu_custom_call.1}
  #allocation0 [shape = 'u32[]', space=smem, size = 0x4, offset = 0x4, fixed_abs, tag = 'smem constant byte address 0x4 - core index']
  #allocation1 [shape = 'u32[144,128]{1,0:T(1,128)}', space=vmem, size = 0x12000, scoped, tag = 'internal scratch']
  #allocation2 [shape = 'f32[1]{0:T(128)S(6)}', space=smem, size = 0x200, scoped, tag = 'scoped memory for tpu_custom_call.1']
  %s0 = inlined_call_operand.<no memory space> [shape: f32[1], index: 0, kind: input, shape index: {}]
  %s1 = inlined_call_operand.hbm [shape: f32[4,512], index: 1, kind: input, shape index: {}, may-alias: {1,2}]
  %s2 = inlined_call_operand.hbm [shape: f32[4,512], index: 2, kind: output, shape index: {}, may-alias: {1,2}]
  %s3 = sld [smem:[#allocation0]]
  $region22: #{tpu_custom_call.1} parent=0
    _
  %s5 = ssub.s32 1, %s3
  %s6 = scalar_select 0, %s5, %s3
  %7 = sst [smem:[#allocation2]] %s0
  $region1: #{tpu_custom_call.1} parent=0
    #allocation3 [shape = 'u8[8192]{0}', space=vmem, size = 0x2000, scoped, tag = 'input window, operand 1, single buffered']
    #allocation4 [shape = 's32[1]{0}', space=sflag, size = 0x4, scoped, tag = 'scoped memory for tpu_custom_call.1']
    #allocation5 [shape = 's32[1]{0}', space=sflag, size = 0x4, scoped, tag = 'scoped memory for tpu_custom_call.1']
    #allocation6 [shape = 'u8[8192]{0}', space=vmem, size = 0x2000, scoped, tag = 'output window, operand 0, single buffered']
    %8 = vsyncpa [#allocation4], 0
    %9 = vsyncpa [#allocation5], 0
    // Predicated region
    $region2: #{tpu_custom_call.1} parent=1 // pred_check
      _
    $region3: #{tpu_custom_call.1} parent=1 // pred_check_branch
      %11 = sbr.rel (0) target = $region5
    $region4: #{tpu_custom_call.1} parent=1 // pred_region
      _
    $region5: #{tpu_custom_call.1} parent=1 // pred_fallthru
      _
    // Predicated region
    $region6: #{tpu_custom_call.1} parent=1 // pred_check
      _
    $region7: #{tpu_custom_call.1} parent=1 // pred_check_branch
      %13 = sbr.rel (0) target = $region9
    $region8: #{tpu_custom_call.1} parent=1 // pred_region
      %s15 = ssub.s32 256, 256
      %16 = vsyncadd [#allocation4], %s15
      %s18 = sshll.u32 [#allocation3], 4
      %s19 = int_to_ptr.vmem [resolvable:$true] %s18
      %21 = dma.hbm_to_vmem [thread:$0]  %s1, 256, %s19, [#allocation4]
    $region9: #{tpu_custom_call.1} parent=1 // pred_fallthru
      _
    // Predicated region
    $region10: #{tpu_custom_call.1} parent=1 // pred_check
      _
    $region11: #{tpu_custom_call.1} parent=1 // pred_check_branch
      %23 = sbr.rel (0) target = $region13
    $region12: #{tpu_custom_call.1} parent=1 // pred_region
      %24 = dma.done [#allocation4], 256
    $region13: #{tpu_custom_call.1} parent=1 // pred_fallthru
      _
    %s25 = sld [smem:[#allocation2]]
    %v26 = vld [vmem:[#allocation3] sm:$0xff]
    %v27 = vld [vmem:[#allocation3 + $0x8] sm:$0xff]
    %v28 = vand.u32 2147483647, %v26
    %v29 = vand.u32 2147483647, %v27
    %v30 = vstv %s25
    %v31 = vadd.f32 %v28, %v30
    %v32 = vadd.f32 %v29, %v30
    %v33 = vmax.f32 %v31, 0.0
    %v34 = vmax.f32 %v32, 0.0
    %v35 = vmul.f32 %v33, %v26
    %v36 = vmul.f32 %v34, %v27
    %v37 = vrcp.pop %v28
    %v38 = vmul.f32 %v35, %v37
    %v39 = vrcp.pop %v29
    %v40 = vmul.f32 %v36, %v39
    %41 = vst [vmem:[#allocation6] sm:$0xff] %v38
    %42 = vst [vmem:[#allocation6 + $0x8] sm:$0xff] %v40
    // Predicated region
    $region14: #{tpu_custom_call.1} parent=1 // pred_check
      _
    $region15: #{tpu_custom_call.1} parent=1 // pred_check_branch
      %44 = sbr.rel (0) target = $region17
    $region16: #{tpu_custom_call.1} parent=1 // pred_region
      %s46 = ssub.s32 256, 256
      %47 = vsyncadd [#allocation5], %s46
      %s49 = sshll.u32 [#allocation6], 4
      %s50 = int_to_ptr.vmem [resolvable:$true] %s49
      %52 = dma.vmem_to_hbm [thread:$0]  %s50, 256, %s2, [#allocation5]
    $region17: #{tpu_custom_call.1} parent=1 // pred_fallthru
      _
    // Predicated region
    $region18: #{tpu_custom_call.1} parent=1 // pred_check
      _
    $region19: #{tpu_custom_call.1} parent=1 // pred_check_branch
      %54 = sbr.rel (0) target = $region21
    $region20: #{tpu_custom_call.1} parent=1 // pred_region
      %55 = dma.done [#allocation5], 256
    $region21: #{tpu_custom_call.1} parent=1 // pred_fallthru
      _
    %56 = vsyncpa [#allocation4], 1
    %57 = vsyncpa [#allocation5], 1

</llo_original>
